<compile_context>
chip_gen: v7x
topology: tpu7x:2x2x1
jax: 0.10.0
libtpu: 0.0.40
codegen_flags: <defaults>
</compile_context>

<pallas_src>
import numpy as np
import jax
import jax.numpy as jnp
from jax.experimental import pallas as pl
from jax.experimental.pallas import tpu as pltpu


def _trainer_kernel(sa_ref, so_ref, x0_ref, nz_ref, temb_ref, w1t_ref, w2t_ref,
                    loss_ref):
    B, C, HW = x0_ref.shape

    for b in range(B):                      # B is small & static -> fully unrolled
        sa = sa_ref[b]                      # extract(sqrt_alphas_bar, t)[b]
        so = so_ref[b]                      # extract(sqrt_one_minus_alphas_bar, t)[b]

        x0 = x0_ref[b]                      # (C, HW), HW on the 128-lane axis
        nz = nz_ref[b]                      # noise = torch.randn_like(x_0)[b]

        # q(x_t | x_0): x_t = sqrt(ab_t) * x_0 + sqrt(1 - ab_t) * noise
        x_t = sa * x0 + so * nz             # (C, HW)

        # synthetic model(x_t, t): pointwise 2-layer MLP over channels + t-embedding.
        # layer 1: h = W1^T @ x_t + temb[t].  K = C is tiny, so do it as C broadcast
        # multiply-adds on the VPU instead of an MXU matmul.
        acc = w1t_ref[:, 0:1] * x_t[0:1, :]              # (HID,1)*(1,HW) -> (HID,HW)
        for c in range(1, C):
            acc = acc + w1t_ref[:, c:c + 1] * x_t[c:c + 1, :]
        h = jnp.maximum(acc + temb_ref[b], 0.0)          # temb_ref[b]: (HID, 1)

        # layer 2: pred = W2^T @ h   ((C, HID) @ (HID, HW) -> (C, HW), lane-dense)
        pred = jnp.dot(w2t_ref[...], h, preferred_element_type=jnp.float32)

        # mse_loss(pred, noise, reduction='none')
        d = pred - nz
        loss_ref[b] = d * d


def make_params(key, C, hidden, T):
    k1, k2, k3 = jax.random.split(key, 3)
    w1 = (jax.random.normal(k1, (C, hidden), dtype=jnp.float32) / np.sqrt(C))
    w2 = (jax.random.normal(k2, (hidden, C), dtype=jnp.float32) / np.sqrt(hidden))
    temb = 0.1 * jax.random.normal(k3, (T, hidden), dtype=jnp.float32)
    return {"w1": w1, "w2": w2, "temb": temb}


def make_schedule(beta_1, beta_T, T):
    # matches torch.linspace(beta_1, beta_T, T).double() + cumprod + sqrt
    betas = np.linspace(beta_1, beta_T, T, dtype=np.float64)
    alphas = 1.0 - betas
    alphas_bar = np.cumprod(alphas, axis=0)
    sqrt_ab = np.sqrt(alphas_bar)
    sqrt_1m_ab = np.sqrt(1.0 - alphas_bar)
    return jnp.asarray(sqrt_ab), jnp.asarray(sqrt_1m_ab)


def gaussian_diffusion_trainer_forward(x0_nchw, key, params, sqrt_ab, sqrt_1m_ab, T):
    B, C, H, W = x0_nchw.shape
    HW = H * W

    k_t, k_noise = jax.random.split(key)
    # t = torch.randint(T, size=(B,))
    t = jax.random.randint(k_t, (B,), 0, T)

    # noise = torch.randn_like(x_0)  (drawn in the wrapper; portable RNG)
    noise = jax.random.normal(k_noise, (B, C, HW), dtype=jnp.float32)

    # glue: the torch.gather in `extract` + per-t embedding row (all tiny)
    sa = sqrt_ab[t].astype(jnp.float32)                 # (B,)
    so = sqrt_1m_ab[t].astype(jnp.float32)              # (B,)
    temb_b = params["temb"][t][:, :, None]              # (B, HID, 1): column broadcast
    w1t = params["w1"].T                                # (HID, C)
    w2t = params["w2"].T                                # (C, HID)

    # NCHW -> (B, C, H*W): FREE reshape (no transpose); HW lands on the lane axis.
    x0 = x0_nchw.reshape(B, C, HW).astype(jnp.float32)

    loss_flat = pl.pallas_call(
        _trainer_kernel,
        out_shape=jax.ShapeDtypeStruct((B, C, HW), jnp.float32),
        in_specs=[
            pl.BlockSpec(memory_space=pltpu.MemorySpace.SMEM),   # sqrt_alphas_bar[t]
            pl.BlockSpec(memory_space=pltpu.MemorySpace.SMEM),   # sqrt_1m_alphas_bar[t]
            pl.BlockSpec(memory_space=pltpu.MemorySpace.VMEM),   # x_0      (B, C, HW)
            pl.BlockSpec(memory_space=pltpu.MemorySpace.VMEM),   # noise    (B, C, HW)
            pl.BlockSpec(memory_space=pltpu.MemorySpace.VMEM),   # temb[t]  (B, HID, 1)
            pl.BlockSpec(memory_space=pltpu.MemorySpace.VMEM),   # W1^T     (HID, C)
            pl.BlockSpec(memory_space=pltpu.MemorySpace.VMEM),   # W2^T     (C, HID)
        ],
        out_specs=pl.BlockSpec(memory_space=pltpu.MemorySpace.VMEM),
    )(sa, so, x0, noise, temb_b, w1t, w2t)

    # (B, C, HW) -> (B, C, H, W): free reshape, matches the PyTorch module's output.
    return loss_flat.reshape(B, C, H, W)


if __name__ == "__main__":
    B, C, H, W = 2, 4, 16, 16
    T = 100
    HIDDEN = 32
    beta_1, beta_T = 1e-4, 0.02

    root = jax.random.PRNGKey(0)
    k_params, k_x, k_fwd = jax.random.split(root, 3)

    params = make_params(k_params, C, HIDDEN, T)
    sqrt_ab, sqrt_1m_ab = make_schedule(beta_1, beta_T, T)

    x_0 = jax.random.normal(k_x, (B, C, H, W), dtype=jnp.float32)

    loss = gaussian_diffusion_trainer_forward(x_0, k_fwd, params, sqrt_ab, sqrt_1m_ab, T)
    loss = jax.block_until_ready(loss)

    assert loss.shape == (B, C, H, W), loss.shape
    assert loss.dtype == jnp.float32
    assert bool(jnp.all(jnp.isfinite(loss)))
    print("KERNEL_OK")
</pallas_src>

<mosaic_0001>
module attributes {stable_mosaic.version = 11 : i64} {
  func.func @_trainer_kernel(%arg0: memref<2xf32, #tpu.memory_space<smem>>, %arg1: memref<2xf32, #tpu.memory_space<smem>>, %arg2: memref<2x4x256xf32, #tpu.memory_space<vmem>>, %arg3: memref<2x4x256xf32, #tpu.memory_space<vmem>>, %arg4: memref<2x32x1xf32, #tpu.memory_space<vmem>>, %arg5: memref<32x4xf32, #tpu.memory_space<vmem>>, %arg6: memref<4x32xf32, #tpu.memory_space<vmem>>, %arg7: memref<2x4x256xf32, #tpu.memory_space<vmem>>) attributes {dimension_semantics = [], scalar_prefetch = 0 : i64, scratch_operands = 0 : i64, tpu.core_type = #tpu.core_type<tc>} {
    %c0 = arith.constant 0 : index
    %0 = memref.load %arg0[%c0] : memref<2xf32, #tpu.memory_space<smem>>
    %c0_0 = arith.constant 0 : index
    %1 = memref.load %arg1[%c0_0] : memref<2xf32, #tpu.memory_space<smem>>
    %c0_1 = arith.constant 0 : index
    %c0_2 = arith.constant 0 : index
    %c0_3 = arith.constant 0 : index
    %2 = vector.load %arg2[%c0_1, %c0_2, %c0_3] : memref<2x4x256xf32, #tpu.memory_space<vmem>>, vector<1x4x256xf32>
    %3 = vector.shape_cast %2 : vector<1x4x256xf32> to vector<4x256xf32>
    %c0_4 = arith.constant 0 : index
    %c0_5 = arith.constant 0 : index
    %c0_6 = arith.constant 0 : index
    %4 = vector.load %arg3[%c0_4, %c0_5, %c0_6] : memref<2x4x256xf32, #tpu.memory_space<vmem>>, vector<1x4x256xf32>
    %5 = vector.shape_cast %4 : vector<1x4x256xf32> to vector<4x256xf32>
    %6 = vector.broadcast %0 : f32 to vector<4x256xf32>
    %7 = arith.mulf %6, %3 : vector<4x256xf32>
    %8 = vector.broadcast %1 : f32 to vector<4x256xf32>
    %9 = arith.mulf %8, %5 : vector<4x256xf32>
    %10 = arith.addf %7, %9 : vector<4x256xf32>
    %c0_7 = arith.constant 0 : index
    %c0_8 = arith.constant 0 : index
    %11 = vector.load %arg5[%c0_7, %c0_8] : memref<32x4xf32, #tpu.memory_space<vmem>>, vector<32x1xf32>
    %12 = vector.extract_strided_slice %10 {offsets = [0, 0], sizes = [1, 256], strides = [1, 1]} : vector<4x256xf32> to vector<1x256xf32>
    %13 = vector.broadcast %11 : vector<32x1xf32> to vector<32x256xf32>
    %14 = vector.broadcast %12 : vector<1x256xf32> to vector<32x256xf32>
    %15 = arith.mulf %13, %14 : vector<32x256xf32>
    %c0_9 = arith.constant 0 : index
    %c1 = arith.constant 1 : index
    %16 = vector.load %arg5[%c0_9, %c1] : memref<32x4xf32, #tpu.memory_space<vmem>>, vector<32x1xf32>
    %17 = vector.extract_strided_slice %10 {offsets = [1, 0], sizes = [1, 256], strides = [1, 1]} : vector<4x256xf32> to vector<1x256xf32>
    %18 = vector.broadcast %16 : vector<32x1xf32> to vector<32x256xf32>
    %19 = vector.broadcast %17 : vector<1x256xf32> to vector<32x256xf32>
    %20 = arith.mulf %18, %19 : vector<32x256xf32>
    %21 = arith.addf %15, %20 : vector<32x256xf32>
    %c0_10 = arith.constant 0 : index
    %c2 = arith.constant 2 : index
    %22 = vector.load %arg5[%c0_10, %c2] : memref<32x4xf32, #tpu.memory_space<vmem>>, vector<32x1xf32>
    %23 = vector.extract_strided_slice %10 {offsets = [2, 0], sizes = [1, 256], strides = [1, 1]} : vector<4x256xf32> to vector<1x256xf32>
    %24 = vector.broadcast %22 : vector<32x1xf32> to vector<32x256xf32>
    %25 = vector.broadcast %23 : vector<1x256xf32> to vector<32x256xf32>
    %26 = arith.mulf %24, %25 : vector<32x256xf32>
    %27 = arith.addf %21, %26 : vector<32x256xf32>
    %c0_11 = arith.constant 0 : index
    %c3 = arith.constant 3 : index
    %28 = vector.load %arg5[%c0_11, %c3] : memref<32x4xf32, #tpu.memory_space<vmem>>, vector<32x1xf32>
    %29 = vector.extract_strided_slice %10 {offsets = [3, 0], sizes = [1, 256], strides = [1, 1]} : vector<4x256xf32> to vector<1x256xf32>
    %30 = vector.broadcast %28 : vector<32x1xf32> to vector<32x256xf32>
    %31 = vector.broadcast %29 : vector<1x256xf32> to vector<32x256xf32>
    %32 = arith.mulf %30, %31 : vector<32x256xf32>
    %33 = arith.addf %27, %32 : vector<32x256xf32>
    %c0_12 = arith.constant 0 : index
    %c0_13 = arith.constant 0 : index
    %c0_14 = arith.constant 0 : index
    %34 = vector.load %arg4[%c0_12, %c0_13, %c0_14] : memref<2x32x1xf32, #tpu.memory_space<vmem>>, vector<1x32x1xf32>
    %35 = vector.shape_cast %34 : vector<1x32x1xf32> to vector<32x1xf32>
    %36 = vector.broadcast %35 : vector<32x1xf32> to vector<32x256xf32>
    %37 = arith.addf %33, %36 : vector<32x256xf32>
    %cst = arith.constant 0.000000e+00 : f32
    %38 = vector.broadcast %cst : f32 to vector<32x256xf32>
    %39 = arith.maximumf %37, %38 : vector<32x256xf32>
    %c0_15 = arith.constant 0 : index
    %c0_16 = arith.constant 0 : index
    %40 = vector.load %arg6[%c0_15, %c0_16] : memref<4x32xf32, #tpu.memory_space<vmem>>, vector<4x32xf32>
    %cst_17 = arith.constant dense<0.000000e+00> : vector<4x256xf32>
    %41 = tpu.matmul %40, %39, %cst_17 {dimension_numbers = #tpu.dot_dimension_numbers<[1], [0], [0], [1], [0, 0, 1, 1], [], []>} : vector<4x32xf32>, vector<32x256xf32>, vector<4x256xf32> -> vector<4x256xf32>
    %42 = arith.subf %41, %5 : vector<4x256xf32>
    %43 = arith.mulf %42, %42 : vector<4x256xf32>
    %c0_18 = arith.constant 0 : index
    %c0_19 = arith.constant 0 : index
    %c0_20 = arith.constant 0 : index
    %44 = vector.load %arg7[%c0_18, %c0_19, %c0_20] : memref<2x4x256xf32, #tpu.memory_space<vmem>>, vector<1x4x256xf32>
    %45 = vector.shape_cast %44 : vector<1x4x256xf32> to vector<4x256xf32>
    %46 = vector.shape_cast %43 : vector<4x256xf32> to vector<1x4x256xf32>
    tpu.vector_store %arg7[%c0_18, %c0_19, %c0_20], %46 {strides = array<i32>} : memref<2x4x256xf32, #tpu.memory_space<vmem>>, vector<1x4x256xf32>,
    %c1_21 = arith.constant 1 : index
    %47 = memref.load %arg0[%c1_21] : memref<2xf32, #tpu.memory_space<smem>>
    %c1_22 = arith.constant 1 : index
    %48 = memref.load %arg1[%c1_22] : memref<2xf32, #tpu.memory_space<smem>>
    %c1_23 = arith.constant 1 : index
    %c0_24 = arith.constant 0 : index
    %c0_25 = arith.constant 0 : index
    %49 = vector.load %arg2[%c1_23, %c0_24, %c0_25] : memref<2x4x256xf32, #tpu.memory_space<vmem>>, vector<1x4x256xf32>
    %50 = vector.shape_cast %49 : vector<1x4x256xf32> to vector<4x256xf32>
    %c1_26 = arith.constant 1 : index
    %c0_27 = arith.constant 0 : index
    %c0_28 = arith.constant 0 : index
    %51 = vector.load %arg3[%c1_26, %c0_27, %c0_28] : memref<2x4x256xf32, #tpu.memory_space<vmem>>, vector<1x4x256xf32>
    %52 = vector.shape_cast %51 : vector<1x4x256xf32> to vector<4x256xf32>
    %53 = vector.broadcast %47 : f32 to vector<4x256xf32>
    %54 = arith.mulf %53, %50 : vector<4x256xf32>
    %55 = vector.broadcast %48 : f32 to vector<4x256xf32>
    %56 = arith.mulf %55, %52 : vector<4x256xf32>
    %57 = arith.addf %54, %56 : vector<4x256xf32>
    %c0_29 = arith.constant 0 : index
    %c0_30 = arith.constant 0 : index
    %58 = vector.load %arg5[%c0_29, %c0_30] : memref<32x4xf32, #tpu.memory_space<vmem>>, vector<32x1xf32>
    %59 = vector.extract_strided_slice %57 {offsets = [0, 0], sizes = [1, 256], strides = [1, 1]} : vector<4x256xf32> to vector<1x256xf32>
    %60 = vector.broadcast %58 : vector<32x1xf32> to vector<32x256xf32>
    %61 = vector.broadcast %59 : vector<1x256xf32> to vector<32x256xf32>
    %62 = arith.mulf %60, %61 : vector<32x256xf32>
    %c0_31 = arith.constant 0 : index
    %c1_32 = arith.constant 1 : index
    %63 = vector.load %arg5[%c0_31, %c1_32] : memref<32x4xf32, #tpu.memory_space<vmem>>, vector<32x1xf32>
    %64 = vector.extract_strided_slice %57 {offsets = [1, 0], sizes = [1, 256], strides = [1, 1]} : vector<4x256xf32> to vector<1x256xf32>
    %65 = vector.broadcast %63 : vector<32x1xf32> to vector<32x256xf32>
    %66 = vector.broadcast %64 : vector<1x256xf32> to vector<32x256xf32>
    %67 = arith.mulf %65, %66 : vector<32x256xf32>
    %68 = arith.addf %62, %67 : vector<32x256xf32>
    %c0_33 = arith.constant 0 : index
    %c2_34 = arith.constant 2 : index
    %69 = vector.load %arg5[%c0_33, %c2_34] : memref<32x4xf32, #tpu.memory_space<vmem>>, vector<32x1xf32>
    %70 = vector.extract_strided_slice %57 {offsets = [2, 0], sizes = [1, 256], strides = [1, 1]} : vector<4x256xf32> to vector<1x256xf32>
    %71 = vector.broadcast %69 : vector<32x1xf32> to vector<32x256xf32>
    %72 = vector.broadcast %70 : vector<1x256xf32> to vector<32x256xf32>
    %73 = arith.mulf %71, %72 : vector<32x256xf32>
    %74 = arith.addf %68, %73 : vector<32x256xf32>
    %c0_35 = arith.constant 0 : index
    %c3_36 = arith.constant 3 : index
    %75 = vector.load %arg5[%c0_35, %c3_36] : memref<32x4xf32, #tpu.memory_space<vmem>>, vector<32x1xf32>
    %76 = vector.extract_strided_slice %57 {offsets = [3, 0], sizes = [1, 256], strides = [1, 1]} : vector<4x256xf32> to vector<1x256xf32>
    %77 = vector.broadcast %75 : vector<32x1xf32> to vector<32x256xf32>
    %78 = vector.broadcast %76 : vector<1x256xf32> to vector<32x256xf32>
    %79 = arith.mulf %77, %78 : vector<32x256xf32>
    %80 = arith.addf %74, %79 : vector<32x256xf32>
    %c1_37 = arith.constant 1 : index
    %c0_38 = arith.constant 0 : index
    %c0_39 = arith.constant 0 : index
    %81 = vector.load %arg4[%c1_37, %c0_38, %c0_39] : memref<2x32x1xf32, #tpu.memory_space<vmem>>, vector<1x32x1xf32>
    %82 = vector.shape_cast %81 : vector<1x32x1xf32> to vector<32x1xf32>
    %83 = vector.broadcast %82 : vector<32x1xf32> to vector<32x256xf32>
    %84 = arith.addf %80, %83 : vector<32x256xf32>
    %cst_40 = arith.constant 0.000000e+00 : f32
    %85 = vector.broadcast %cst_40 : f32 to vector<32x256xf32>
    %86 = arith.maximumf %84, %85 : vector<32x256xf32>
    %c0_41 = arith.constant 0 : index
    %c0_42 = arith.constant 0 : index
    %87 = vector.load %arg6[%c0_41, %c0_42] : memref<4x32xf32, #tpu.memory_space<vmem>>, vector<4x32xf32>
    %cst_43 = arith.constant dense<0.000000e+00> : vector<4x256xf32>
    %88 = tpu.matmul %87, %86, %cst_43 {dimension_numbers = #tpu.dot_dimension_numbers<[1], [0], [0], [1], [0, 0, 1, 1], [], []>} : vector<4x32xf32>, vector<32x256xf32>, vector<4x256xf32> -> vector<4x256xf32>
    %89 = arith.subf %88, %52 : vector<4x256xf32>
    %90 = arith.mulf %89, %89 : vector<4x256xf32>
    %c1_44 = arith.constant 1 : index
    %c0_45 = arith.constant 0 : index
    %c0_46 = arith.constant 0 : index
    %91 = vector.load %arg7[%c1_44, %c0_45, %c0_46] : memref<2x4x256xf32, #tpu.memory_space<vmem>>, vector<1x4x256xf32>
    %92 = vector.shape_cast %91 : vector<1x4x256xf32> to vector<4x256xf32>
    %93 = vector.shape_cast %90 : vector<4x256xf32> to vector<1x4x256xf32>
    tpu.vector_store %arg7[%c1_44, %c0_45, %c0_46], %93 {strides = array<i32>} : memref<2x4x256xf32, #tpu.memory_space<vmem>>, vector<1x4x256xf32>,
    return
  }
}

</mosaic_0001>

<llo_original>
// kernel: tpu_custom_call.1
$region0: #{tpu_custom_call.1}
  #allocation0 [shape = 'u32[]', space=smem, size = 0x4, offset = 0x4, fixed_abs, tag = 'smem constant byte address 0x4 - core index']
  #allocation1 [shape = 'u32[144,128]{1,0:T(1,128)}', space=vmem, size = 0x12000, scoped, tag = 'internal scratch']
  %s0 = inlined_call_operand.vmem [shape: f32[2], index: 0, kind: input, shape index: {}]
  %s1 = inlined_call_operand.vmem [shape: f32[2], index: 1, kind: input, shape index: {}]
  %s2 = inlined_call_operand.vmem [shape: f32[2,4,256], index: 2, kind: input, shape index: {}]
  %s3 = inlined_call_operand.vmem [shape: f32[2,4,256], index: 3, kind: input, shape index: {}]
  %s4 = inlined_call_operand.vmem [shape: f32[2,32,1], index: 4, kind: input, shape index: {}]
  %s5 = inlined_call_operand.vmem [shape: f32[32,4], index: 5, kind: input, shape index: {}]
  %s6 = inlined_call_operand.vmem [shape: f32[4,32], index: 6, kind: input, shape index: {}]
  %s7 = inlined_call_operand.hbm [shape: f32[2,4,256], index: 7, kind: output, shape index: {}]
  %s8 = sld [smem:[#allocation0]]
  $region46: #{tpu_custom_call.1} parent=0
    _
  %s10 = ssub.s32 1, %s8
  %s11 = scalar_select 0, %s10, %s8
  $region1: #{tpu_custom_call.1} parent=0
    #allocation2 [shape = 'u8[512]{0}', space=smem, size = 0x200, scoped, tag = 'input window, operand 0, single buffered']
    #allocation3 [shape = 's32[1]{0}', space=sflag, size = 0x4, scoped, tag = 'scoped memory for tpu_custom_call.1']
    #allocation4 [shape = 's32[1]{0}', space=sflag, size = 0x4, scoped, tag = 'scoped memory for tpu_custom_call.1']
    #allocation5 [shape = 'u8[512]{0}', space=smem, size = 0x200, scoped, tag = 'input window, operand 1, single buffered']
    #allocation6 [shape = 's32[1]{0}', space=sflag, size = 0x4, scoped, tag = 'scoped memory for tpu_custom_call.1']
    #allocation7 [shape = 'u8[8192]{0}', space=vmem, size = 0x2000, scoped, tag = 'output window, operand 0, single buffered']
    %12 = vsyncpa [#allocation4], 0
    %13 = vsyncpa [#allocation6], 0
    %14 = vsyncpa [#allocation3], 0
    // Predicated region
    $region2: #{tpu_custom_call.1} parent=1 // pred_check
      _
    $region3: #{tpu_custom_call.1} parent=1 // pred_check_branch
      %16 = sbr.rel (0) target = $region5
    $region4: #{tpu_custom_call.1} parent=1 // pred_region
      %s18 = ssub.s32 16, 16
      %19 = vsyncadd [#allocation4], %s18
      %s21 = sshll.u32 %s0, 4
      %s22 = int_to_ptr.vmem [resolvable:$true] %s21
      %24 = dma.vmem_to_smem %s22, 16, [#allocation2], [#allocation4]
    $region5: #{tpu_custom_call.1} parent=1 // pred_fallthru
      _
    // Predicated region
    $region6: #{tpu_custom_call.1} parent=1 // pred_check
      _
    $region7: #{tpu_custom_call.1} parent=1 // pred_check_branch
      %26 = sbr.rel (0) target = $region9
    $region8: #{tpu_custom_call.1} parent=1 // pred_region
      %s28 = ssub.s32 16, 16
      %29 = vsyncadd [#allocation6], %s28
      %s31 = sshll.u32 %s1, 4
      %s32 = int_to_ptr.vmem [resolvable:$true] %s31
      %34 = dma.vmem_to_smem %s32, 16, [#allocation5], [#allocation6]
    $region9: #{tpu_custom_call.1} parent=1 // pred_fallthru
      _
    // Predicated region
    $region10: #{tpu_custom_call.1} parent=1 // pred_check
      _
    $region11: #{tpu_custom_call.1} parent=1 // pred_check_branch
      %36 = sbr.rel (0) target = $region13
    $region12: #{tpu_custom_call.1} parent=1 // pred_region
      _
    $region13: #{tpu_custom_call.1} parent=1 // pred_fallthru
      _
    // Predicated region
    $region14: #{tpu_custom_call.1} parent=1 // pred_check
      _
    $region15: #{tpu_custom_call.1} parent=1 // pred_check_branch
      %38 = sbr.rel (0) target = $region17
    $region16: #{tpu_custom_call.1} parent=1 // pred_region
      _
    $region17: #{tpu_custom_call.1} parent=1 // pred_fallthru
      _
    // Predicated region
    $region18: #{tpu_custom_call.1} parent=1 // pred_check
      _
    $region19: #{tpu_custom_call.1} parent=1 // pred_check_branch
      %40 = sbr.rel (0) target = $region21
    $region20: #{tpu_custom_call.1} parent=1 // pred_region
      _
    $region21: #{tpu_custom_call.1} parent=1 // pred_fallthru
      _
    // Predicated region
    $region22: #{tpu_custom_call.1} parent=1 // pred_check
      _
    $region23: #{tpu_custom_call.1} parent=1 // pred_check_branch
      %42 = sbr.rel (0) target = $region25
    $region24: #{tpu_custom_call.1} parent=1 // pred_region
      _
    $region25: #{tpu_custom_call.1} parent=1 // pred_fallthru
      _
    // Predicated region
    $region26: #{tpu_custom_call.1} parent=1 // pred_check
      _
    $region27: #{tpu_custom_call.1} parent=1 // pred_check_branch
      %44 = sbr.rel (0) target = $region29
    $region28: #{tpu_custom_call.1} parent=1 // pred_region
      _
    $region29: #{tpu_custom_call.1} parent=1 // pred_fallthru
      _
    // Predicated region
    $region30: #{tpu_custom_call.1} parent=1 // pred_check
      _
    $region31: #{tpu_custom_call.1} parent=1 // pred_check_branch
      %46 = sbr.rel (0) target = $region33
    $region32: #{tpu_custom_call.1} parent=1 // pred_region
      %47 = dma.done [#allocation4], 16
    $region33: #{tpu_custom_call.1} parent=1 // pred_fallthru
      _
    // Predicated region
    $region34: #{tpu_custom_call.1} parent=1 // pred_check
      _
    $region35: #{tpu_custom_call.1} parent=1 // pred_check_branch
      %49 = sbr.rel (0) target = $region37
    $region36: #{tpu_custom_call.1} parent=1 // pred_region
      %50 = dma.done [#allocation6], 16
    $region37: #{tpu_custom_call.1} parent=1 // pred_fallthru
      _
    %51 = sfence
    %s52 = sld [smem:[#allocation2]]
    %s53 = sld [smem:[#allocation5]]
    %v54 = vld [vmem:[%s2] sm:$0xff]
    %v55 = vld [vmem:[%s3] sm:$0xff]
    %v56 = vstv %s52
    %v57 = vmul.f32 %v56, %v54
    %v58 = vstv %s53
    %v59 = vmul.f32 %v58, %v55
    %v60 = vadd.f32 %v57, %v59
    %v61 = vld [vmem:[%s5] sm:$0xff]
    %v62 = vld [vmem:[%s5 + $0x8] sm:$0xff]
    %v63 = vld [vmem:[%s5 + $0x10] sm:$0xff]
    %v64 = vld [vmem:[%s5 + $0x18] sm:$0xff]
    %66 = vset.pattern.permute.xlu0 0
    %67 = vperm.xlu0 %66, %v61
    %v68 = vpop.permute.xlu0 %67
    %71 = vset.pattern.permute.xlu0 0
    %72 = vperm.xlu0 %71, %v62
    %v73 = vpop.permute.xlu0 %72
    %76 = vset.pattern.permute.xlu0 0
    %77 = vperm.xlu0 %76, %v63
    %v78 = vpop.permute.xlu0 %77
    %81 = vset.pattern.permute.xlu0 0
    %82 = vperm.xlu0 %81, %v64
    %v83 = vpop.permute.xlu0 %82
    %v86 = vlaneseq
    %v87 = vshrl.u32 %v86, 7
    %v88 = vsub.s32 0, %v87
    %v89 = vrot.slane %v60, %v88
    %v90 = vlaneseq
    %v91 = vshrl.u32 %v90, 7
    %v92 = vsub.s32 4, %v91
    %v93 = vrot.slane %v60, %v92
    %v96 = vlaneseq
    %v97 = vshrl.u32 %v96, 7
    %v98 = vsub.s32 0, %v97
    %v99 = vrot.slane %v89, %v98
    %v100 = vlaneseq
    %v101 = vshrl.u32 %v100, 7
    %v102 = vsub.s32 0, %v101
    %v103 = vrot.slane %v93, %v102
    %v104 = vmul.f32 %v68, %v99
    %v105 = vmul.f32 %v68, %v103
    %v106 = vmul.f32 %v73, %v99
    %v107 = vmul.f32 %v73, %v103
    %v108 = vmul.f32 %v78, %v99
    %v109 = vmul.f32 %v78, %v103
    %v110 = vmul.f32 %v83, %v99
    %v111 = vmul.f32 %v83, %v103
    %112 = vset.pattern.permute.xlu0 1
    %113 = vperm.xlu0 %112, %v61
    %v114 = vpop.permute.xlu0 %113
    %116 = vset.pattern.permute.xlu0 1
    %117 = vperm.xlu0 %116, %v62
    %v118 = vpop.permute.xlu0 %117
    %120 = vset.pattern.permute.xlu0 1
    %121 = vperm.xlu0 %120, %v63
    %v122 = vpop.permute.xlu0 %121
    %124 = vset.pattern.permute.xlu0 1
    %125 = vperm.xlu0 %124, %v64
    %v126 = vpop.permute.xlu0 %125
    %v128 = vlaneseq
    %v129 = vshrl.u32 %v128, 7
    %v130 = vsub.s32 1, %v129
    %v131 = vrot.slane %v60, %v130
    %v132 = vlaneseq
    %v133 = vshrl.u32 %v132, 7
    %v134 = vsub.s32 5, %v133
    %v135 = vrot.slane %v60, %v134
    %v138 = vlaneseq
    %v139 = vshrl.u32 %v138, 7
    %v140 = vsub.s32 1, %v139
    %v141 = vrot.slane %v131, %v140
    %v142 = vlaneseq
    %v143 = vshrl.u32 %v142, 7
    %v144 = vsub.s32 1, %v143
    %v145 = vrot.slane %v135, %v144
    %v146 = vmul.f32 %v114, %v141
    %v147 = vmul.f32 %v114, %v145
    %v148 = vmul.f32 %v118, %v141
    %v149 = vmul.f32 %v118, %v145
    %v150 = vmul.f32 %v122, %v141
    %v151 = vmul.f32 %v122, %v145
    %v152 = vmul.f32 %v126, %v141
    %v153 = vmul.f32 %v126, %v145
    %v154 = vadd.f32 %v104, %v146
    %v155 = vadd.f32 %v105, %v147
    %v156 = vadd.f32 %v106, %v148
    %v157 = vadd.f32 %v107, %v149
    %v158 = vadd.f32 %v108, %v150
    %v159 = vadd.f32 %v109, %v151
    %v160 = vadd.f32 %v110, %v152
    %v161 = vadd.f32 %v111, %v153
    %162 = vset.pattern.permute.xlu0 2
    %163 = vperm.xlu0 %162, %v61
    %v164 = vpop.permute.xlu0 %163
    %166 = vset.pattern.permute.xlu0 2
    %167 = vperm.xlu0 %166, %v62
    %v168 = vpop.permute.xlu0 %167
    %170 = vset.pattern.permute.xlu0 2
    %171 = vperm.xlu0 %170, %v63
    %v172 = vpop.permute.xlu0 %171
    %174 = vset.pattern.permute.xlu0 2
    %175 = vperm.xlu0 %174, %v64
    %v176 = vpop.permute.xlu0 %175
    %v178 = vlaneseq
    %v179 = vshrl.u32 %v178, 7
    %v180 = vsub.s32 2, %v179
    %v181 = vrot.slane %v60, %v180
    %v182 = vlaneseq
    %v183 = vshrl.u32 %v182, 7
    %v184 = vsub.s32 6, %v183
    %v185 = vrot.slane %v60, %v184
    %v188 = vlaneseq
    %v189 = vshrl.u32 %v188, 7
    %v190 = vsub.s32 2, %v189
    %v191 = vrot.slane %v181, %v190
    %v192 = vlaneseq
    %v193 = vshrl.u32 %v192, 7
    %v194 = vsub.s32 2, %v193
    %v195 = vrot.slane %v185, %v194
    %v196 = vmul.f32 %v164, %v191
    %v197 = vmul.f32 %v164, %v195
    %v198 = vmul.f32 %v168, %v191
    %v199 = vmul.f32 %v168, %v195
    %v200 = vmul.f32 %v172, %v191
    %v201 = vmul.f32 %v172, %v195
    %v202 = vmul.f32 %v176, %v191
    %v203 = vmul.f32 %v176, %v195
    %v204 = vadd.f32 %v154, %v196
    %v205 = vadd.f32 %v155, %v197
    %v206 = vadd.f32 %v156, %v198
    %v207 = vadd.f32 %v157, %v199
    %v208 = vadd.f32 %v158, %v200
    %v209 = vadd.f32 %v159, %v201
    %v210 = vadd.f32 %v160, %v202
    %v211 = vadd.f32 %v161, %v203
    %212 = vset.pattern.permute.xlu0 3
    %213 = vperm.xlu0 %212, %v61
    %v214 = vpop.permute.xlu0 %213
    %216 = vset.pattern.permute.xlu0 3
    %217 = vperm.xlu0 %216, %v62
    %v218 = vpop.permute.xlu0 %217
    %220 = vset.pattern.permute.xlu0 3
    %221 = vperm.xlu0 %220, %v63
    %v222 = vpop.permute.xlu0 %221
    %224 = vset.pattern.permute.xlu0 3
    %225 = vperm.xlu0 %224, %v64
    %v226 = vpop.permute.xlu0 %225
    %v228 = vlaneseq
    %v229 = vshrl.u32 %v228, 7
    %v230 = vsub.s32 3, %v229
    %v231 = vrot.slane %v60, %v230
    %v232 = vlaneseq
    %v233 = vshrl.u32 %v232, 7
    %v234 = vsub.s32 7, %v233
    %v235 = vrot.slane %v60, %v234
    %v238 = vlaneseq
    %v239 = vshrl.u32 %v238, 7
    %v240 = vsub.s32 3, %v239
    %v241 = vrot.slane %v231, %v240
    %v242 = vlaneseq
    %v243 = vshrl.u32 %v242, 7
    %v244 = vsub.s32 3, %v243
    %v245 = vrot.slane %v235, %v244
    %v246 = vmul.f32 %v214, %v241
    %v247 = vmul.f32 %v214, %v245
    %v248 = vmul.f32 %v218, %v241
    %v249 = vmul.f32 %v218, %v245
    %v250 = vmul.f32 %v222, %v241
    %v251 = vmul.f32 %v222, %v245
    %v252 = vmul.f32 %v226, %v241
    %v253 = vmul.f32 %v226, %v245
    %v254 = vadd.f32 %v204, %v246
    %v255 = vadd.f32 %v205, %v247
    %v256 = vadd.f32 %v206, %v248
    %v257 = vadd.f32 %v207, %v249
    %v258 = vadd.f32 %v208, %v250
    %v259 = vadd.f32 %v209, %v251
    %v260 = vadd.f32 %v210, %v252
    %v261 = vadd.f32 %v211, %v253
    %v262 = vld [vmem:[%s4] sm:$0xff]
    %v263 = vld [vmem:[%s4 + $0x8] sm:$0xff]
    %v264 = vld [vmem:[%s4 + $0x10] sm:$0xff]
    %v265 = vld [vmem:[%s4 + $0x18] sm:$0xff]
    %267 = vset.pattern.permute.xlu0 0
    %268 = vperm.xlu0 %267, %v262
    %v269 = vpop.permute.xlu0 %268
    %272 = vset.pattern.permute.xlu0 0
    %273 = vperm.xlu0 %272, %v263
    %v274 = vpop.permute.xlu0 %273
    %277 = vset.pattern.permute.xlu0 0
    %278 = vperm.xlu0 %277, %v264
    %v279 = vpop.permute.xlu0 %278
    %282 = vset.pattern.permute.xlu0 0
    %283 = vperm.xlu0 %282, %v265
    %v284 = vpop.permute.xlu0 %283
    %v286 = vadd.f32 %v254, %v269
    %v287 = vadd.f32 %v255, %v269
    %v288 = vadd.f32 %v256, %v274
    %v289 = vadd.f32 %v257, %v274
    %v290 = vadd.f32 %v258, %v279
    %v291 = vadd.f32 %v259, %v279
    %v292 = vadd.f32 %v260, %v284
    %v293 = vadd.f32 %v261, %v284
    %v294 = vmax.f32 %v286, 0.0
    %v295 = vmax.f32 %v287, 0.0
    %v296 = vmax.f32 %v288, 0.0
    %v297 = vmax.f32 %v289, 0.0
    %v298 = vmax.f32 %v290, 0.0
    %v299 = vmax.f32 %v291, 0.0
    %v300 = vmax.f32 %v292, 0.0
    %v301 = vmax.f32 %v293, 0.0
    %v302 = vld [vmem:[%s6] sm:$0xf]
    %vm303 = vcmask 261120
    %v305 = vsel %vm303, %v302, 0
    %307 = vmatprep.subr.mxu0 %v295
    %308 = vmatpush1.msra.mxu0 %v294
    %309 = vmatprep.subr.mxu0 %v297
    %310 = vmatpush1.msra.mxu0 %v296
    %311 = vmatprep.subr.mxu0 %v299
    %312 = vmatpush1.msra.mxu0 %v298
    %313 = vmatprep.subr.mxu0 %v301
    %314 = vmatpush1.msra.mxu0 %v300
    %315 = vmatprep.subr.mxu0 0.0
    %316 = vmatpush1.msra.mxu0 0.0
    %317 = vmatprep.subr.mxu0 0.0
    %318 = vmatpush1.msra.mxu0 0.0
    %319 = vmatprep.subr.mxu0 0.0
    %320 = vmatpush1.msra.mxu0 0.0
    %321 = vmatprep.subr.mxu0 0.0
    %322 = vmatpush1.msra.mxu0 0.0
    %323 = vmatprep.subr.mxu0 0.0
    %324 = vmatpush1.msra.mxu0 0.0
    %325 = vmatprep.subr.mxu0 0.0
    %326 = vmatpush1.msra.mxu0 0.0
    %327 = vmatprep.subr.mxu0 0.0
    %328 = vmatpush1.msra.mxu0 0.0
    %329 = vmatprep.subr.mxu0 0.0
    %330 = vmatpush1.msra.mxu0 0.0
    %331 = vmatprep.subr.mxu0 0.0
    %332 = vmatpush1.msra.mxu0 0.0
    %333 = vmatprep.subr.mxu0 0.0
    %334 = vmatpush1.msra.mxu0 0.0
    %335 = vmatprep.subr.mxu0 0.0
    %336 = vmatpush1.msra.mxu0 0.0
    %337 = vmatprep.subr.mxu0 0.0
    %338 = vmatpush1.msra.mxu0 0.0
    %339 = vmatprep.subr.mxu0 0.0
    %340 = vmatpush1.msra.mxu0 0.0
    %341 = vmatprep.subr.mxu0 0.0
    %342 = vmatpush1.msra.mxu0 0.0
    %343 = vmatprep.subr.mxu0 0.0
    %344 = vmatpush1.msra.mxu0 0.0
    %345 = vmatprep.subr.mxu0 0.0
    %346 = vmatpush1.msra.mxu0 0.0
    %347 = vmatprep.subr.mxu0 0.0
    %348 = vmatpush1.msra.mxu0 0.0
    %349 = vmatprep.subr.mxu0 0.0
    %350 = vmatpush1.msra.mxu0 0.0
    %351 = vmatprep.subr.mxu0 0.0
    %352 = vmatpush1.msra.mxu0 0.0
    %353 = vmatprep.subr.mxu0 0.0
    %354 = vmatpush1.msra.mxu0 0.0
    %355 = vmatprep.subr.mxu0 0.0
    %356 = vmatpush1.msra.mxu0 0.0
    %357 = vmatprep.subr.mxu0 0.0
    %358 = vmatpush1.msra.mxu0 0.0
    %359 = vmatprep.subr.mxu0 0.0
    %360 = vmatpush1.msra.mxu0 0.0
    %361 = vmatprep.subr.mxu0 0.0
    %362 = vmatpush1.msra.mxu0 0.0
    %363 = vmatprep.subr.mxu0 0.0
    %364 = vmatpush1.msra.mxu0 0.0
    %365 = vmatprep.subr.mxu0 0.0
    %366 = vmatpush1.msra.mxu0 0.0
    %367 = vmatprep.subr.mxu0 0.0
    %368 = vmatpush1.msra.mxu0 0.0
    %369 = vmatprep.subr.mxu0 0.0
    %370 = vmatpush1.msra.mxu0 0.0
    %371 = vmatprep.mubr.f32.mxu0 0.0
    %372 = vmatmul.mubr.f32.gmra.mrb[0].mxu0 %v305
    %v373 = vpop.f32.mrb[0].mxu0
    %v374 = vadd.f32 0.0, %v373
    %v375 = vpop.f32.mrb[0].mxu0
    %v376 = vadd.f32 0.0, %v375
    %377 = vdwg.mxu0
    %v379 = vcombine.high %v55, %v55
    %v381 = vsub.f32 %v374, %v55
    %v382 = vsub.f32 %v376, %v379
    %v383 = vmul.f32 %v381, %v381
    %v384 = vmul.f32 %v382, %v382
    %v387 = vcombine.low %v383, %v384
    %389 = vst [vmem:[#allocation7] sm:$0xff] %v387
    %s390 = sld [smem:[#allocation2 + $0x1]]
    %s391 = sld [smem:[#allocation5 + $0x1]]
    %s392 = scalar_lea.vmem %s2, 8
    %v393 = vld [vmem:[%s392] sm:$0xff]
    %s394 = scalar_lea.vmem %s3, 8
    %v395 = vld [vmem:[%s394] sm:$0xff]
    %v396 = vstv %s390
    %v397 = vmul.f32 %v396, %v393
    %v398 = vstv %s391
    %v399 = vmul.f32 %v398, %v395
    %v400 = vadd.f32 %v397, %v399
    %v401 = vld [vmem:[%s5] sm:$0xff]
    %v402 = vld [vmem:[%s5 + $0x8] sm:$0xff]
    %v403 = vld [vmem:[%s5 + $0x10] sm:$0xff]
    %v404 = vld [vmem:[%s5 + $0x18] sm:$0xff]
    %406 = vset.pattern.permute.xlu0 0
    %407 = vperm.xlu0 %406, %v401
    %v408 = vpop.permute.xlu0 %407
    %411 = vset.pattern.permute.xlu0 0
    %412 = vperm.xlu0 %411, %v402
    %v413 = vpop.permute.xlu0 %412
    %416 = vset.pattern.permute.xlu0 0
    %417 = vperm.xlu0 %416, %v403
    %v418 = vpop.permute.xlu0 %417
    %421 = vset.pattern.permute.xlu0 0
    %422 = vperm.xlu0 %421, %v404
    %v423 = vpop.permute.xlu0 %422
    %v426 = vlaneseq
    %v427 = vshrl.u32 %v426, 7
    %v428 = vsub.s32 0, %v427
    %v429 = vrot.slane %v400, %v428
    %v430 = vlaneseq
    %v431 = vshrl.u32 %v430, 7
    %v432 = vsub.s32 4, %v431
    %v433 = vrot.slane %v400, %v432
    %v436 = vlaneseq
    %v437 = vshrl.u32 %v436, 7
    %v438 = vsub.s32 0, %v437
    %v439 = vrot.slane %v429, %v438
    %v440 = vlaneseq
    %v441 = vshrl.u32 %v440, 7
    %v442 = vsub.s32 0, %v441
    %v443 = vrot.slane %v433, %v442
    %v444 = vmul.f32 %v408, %v439
    %v445 = vmul.f32 %v408, %v443
    %v446 = vmul.f32 %v413, %v439
    %v447 = vmul.f32 %v413, %v443
    %v448 = vmul.f32 %v418, %v439
    %v449 = vmul.f32 %v418, %v443
    %v450 = vmul.f32 %v423, %v439
    %v451 = vmul.f32 %v423, %v443
    %452 = vset.pattern.permute.xlu0 1
    %453 = vperm.xlu0 %452, %v401
    %v454 = vpop.permute.xlu0 %453
    %456 = vset.pattern.permute.xlu0 1
    %457 = vperm.xlu0 %456, %v402
    %v458 = vpop.permute.xlu0 %457
    %460 = vset.pattern.permute.xlu0 1
    %461 = vperm.xlu0 %460, %v403
    %v462 = vpop.permute.xlu0 %461
    %464 = vset.pattern.permute.xlu0 1
    %465 = vperm.xlu0 %464, %v404
    %v466 = vpop.permute.xlu0 %465
    %v468 = vlaneseq
    %v469 = vshrl.u32 %v468, 7
    %v470 = vsub.s32 1, %v469
    %v471 = vrot.slane %v400, %v470
    %v472 = vlaneseq
    %v473 = vshrl.u32 %v472, 7
    %v474 = vsub.s32 5, %v473
    %v475 = vrot.slane %v400, %v474
    %v478 = vlaneseq
    %v479 = vshrl.u32 %v478, 7
    %v480 = vsub.s32 1, %v479
    %v481 = vrot.slane %v471, %v480
    %v482 = vlaneseq
    %v483 = vshrl.u32 %v482, 7
    %v484 = vsub.s32 1, %v483
    %v485 = vrot.slane %v475, %v484
    %v486 = vmul.f32 %v454, %v481
    %v487 = vmul.f32 %v454, %v485
    %v488 = vmul.f32 %v458, %v481
    %v489 = vmul.f32 %v458, %v485
    %v490 = vmul.f32 %v462, %v481
    %v491 = vmul.f32 %v462, %v485
    %v492 = vmul.f32 %v466, %v481
    %v493 = vmul.f32 %v466, %v485
    %v494 = vadd.f32 %v444, %v486
    %v495 = vadd.f32 %v445, %v487
    %v496 = vadd.f32 %v446, %v488
    %v497 = vadd.f32 %v447, %v489
    %v498 = vadd.f32 %v448, %v490
    %v499 = vadd.f32 %v449, %v491
    %v500 = vadd.f32 %v450, %v492
    %v501 = vadd.f32 %v451, %v493
    %502 = vset.pattern.permute.xlu0 2
    %503 = vperm.xlu0 %502, %v401
    %v504 = vpop.permute.xlu0 %503
    %506 = vset.pattern.permute.xlu0 2
    %507 = vperm.xlu0 %506, %v402
    %v508 = vpop.permute.xlu0 %507
    %510 = vset.pattern.permute.xlu0 2
    %511 = vperm.xlu0 %510, %v403
    %v512 = vpop.permute.xlu0 %511
    %514 = vset.pattern.permute.xlu0 2
    %515 = vperm.xlu0 %514, %v404
    %v516 = vpop.permute.xlu0 %515
    %v518 = vlaneseq
    %v519 = vshrl.u32 %v518, 7
    %v520 = vsub.s32 2, %v519
    %v521 = vrot.slane %v400, %v520
    %v522 = vlaneseq
    %v523 = vshrl.u32 %v522, 7
    %v524 = vsub.s32 6, %v523
    %v525 = vrot.slane %v400, %v524
    %v528 = vlaneseq
    %v529 = vshrl.u32 %v528, 7
    %v530 = vsub.s32 2, %v529
    %v531 = vrot.slane %v521, %v530
    %v532 = vlaneseq
    %v533 = vshrl.u32 %v532, 7
    %v534 = vsub.s32 2, %v533
    %v535 = vrot.slane %v525, %v534
    %v536 = vmul.f32 %v504, %v531
    %v537 = vmul.f32 %v504, %v535
    %v538 = vmul.f32 %v508, %v531
    %v539 = vmul.f32 %v508, %v535
    %v540 = vmul.f32 %v512, %v531
    %v541 = vmul.f32 %v512, %v535
    %v542 = vmul.f32 %v516, %v531
    %v543 = vmul.f32 %v516, %v535
    %v544 = vadd.f32 %v494, %v536
    %v545 = vadd.f32 %v495, %v537
    %v546 = vadd.f32 %v496, %v538
    %v547 = vadd.f32 %v497, %v539
    %v548 = vadd.f32 %v498, %v540
    %v549 = vadd.f32 %v499, %v541
    %v550 = vadd.f32 %v500, %v542
    %v551 = vadd.f32 %v501, %v543
    %552 = vset.pattern.permute.xlu0 3
    %553 = vperm.xlu0 %552, %v401
    %v554 = vpop.permute.xlu0 %553
    %556 = vset.pattern.permute.xlu0 3
    %557 = vperm.xlu0 %556, %v402
    %v558 = vpop.permute.xlu0 %557
    %560 = vset.pattern.permute.xlu0 3
    %561 = vperm.xlu0 %560, %v403
    %v562 = vpop.permute.xlu0 %561
    %564 = vset.pattern.permute.xlu0 3
    %565 = vperm.xlu0 %564, %v404
    %v566 = vpop.permute.xlu0 %565
    %v568 = vlaneseq
    %v569 = vshrl.u32 %v568, 7
    %v570 = vsub.s32 3, %v569
    %v571 = vrot.slane %v400, %v570
    %v572 = vlaneseq
    %v573 = vshrl.u32 %v572, 7
    %v574 = vsub.s32 7, %v573
    %v575 = vrot.slane %v400, %v574
    %v578 = vlaneseq
    %v579 = vshrl.u32 %v578, 7
    %v580 = vsub.s32 3, %v579
    %v581 = vrot.slane %v571, %v580
    %v582 = vlaneseq
    %v583 = vshrl.u32 %v582, 7
    %v584 = vsub.s32 3, %v583
    %v585 = vrot.slane %v575, %v584
    %v586 = vmul.f32 %v554, %v581
    %v587 = vmul.f32 %v554, %v585
    %v588 = vmul.f32 %v558, %v581
    %v589 = vmul.f32 %v558, %v585
    %v590 = vmul.f32 %v562, %v581
    %v591 = vmul.f32 %v562, %v585
    %v592 = vmul.f32 %v566, %v581
    %v593 = vmul.f32 %v566, %v585
    %v594 = vadd.f32 %v544, %v586
    %v595 = vadd.f32 %v545, %v587
    %v596 = vadd.f32 %v546, %v588
    %v597 = vadd.f32 %v547, %v589
    %v598 = vadd.f32 %v548, %v590
    %v599 = vadd.f32 %v549, %v591
    %v600 = vadd.f32 %v550, %v592
    %v601 = vadd.f32 %v551, %v593
    %s602 = scalar_lea.vmem %s4, 32
    %v603 = vld [vmem:[%s602] sm:$0xff]
    %v604 = vld [vmem:[%s602 + $0x8] sm:$0xff]
    %v605 = vld [vmem:[%s602 + $0x10] sm:$0xff]
    %v606 = vld [vmem:[%s602 + $0x18] sm:$0xff]
    %608 = vset.pattern.permute.xlu0 0
    %609 = vperm.xlu0 %608, %v603
    %v610 = vpop.permute.xlu0 %609
    %613 = vset.pattern.permute.xlu0 0
    %614 = vperm.xlu0 %613, %v604
    %v615 = vpop.permute.xlu0 %614
    %618 = vset.pattern.permute.xlu0 0
    %619 = vperm.xlu0 %618, %v605
    %v620 = vpop.permute.xlu0 %619
    %623 = vset.pattern.permute.xlu0 0
    %624 = vperm.xlu0 %623, %v606
    %v625 = vpop.permute.xlu0 %624
    %v627 = vadd.f32 %v594, %v610
    %v628 = vadd.f32 %v595, %v610
    %v629 = vadd.f32 %v596, %v615
    %v630 = vadd.f32 %v597, %v615
    %v631 = vadd.f32 %v598, %v620
    %v632 = vadd.f32 %v599, %v620
    %v633 = vadd.f32 %v600, %v625
    %v634 = vadd.f32 %v601, %v625
    %v635 = vmax.f32 %v627, 0.0
    %v636 = vmax.f32 %v628, 0.0
    %v637 = vmax.f32 %v629, 0.0
    %v638 = vmax.f32 %v630, 0.0
    %v639 = vmax.f32 %v631, 0.0
    %v640 = vmax.f32 %v632, 0.0
    %v641 = vmax.f32 %v633, 0.0
    %v642 = vmax.f32 %v634, 0.0
    %v643 = vld [vmem:[%s6] sm:$0xf]
    %v645 = vsel %vm303, %v643, 0
    %647 = vmatprep.subr.mxu0 %v636
    %648 = vmatpush1.msra.mxu0 %v635
    %649 = vmatprep.subr.mxu0 %v638
    %650 = vmatpush1.msra.mxu0 %v637
    %651 = vmatprep.subr.mxu0 %v640
    %652 = vmatpush1.msra.mxu0 %v639
    %653 = vmatprep.subr.mxu0 %v642
    %654 = vmatpush1.msra.mxu0 %v641
    %655 = vmatprep.subr.mxu0 0.0
    %656 = vmatpush1.msra.mxu0 0.0
    %657 = vmatprep.subr.mxu0 0.0
    %658 = vmatpush1.msra.mxu0 0.0
    %659 = vmatprep.subr.mxu0 0.0
    %660 = vmatpush1.msra.mxu0 0.0
    %661 = vmatprep.subr.mxu0 0.0
    %662 = vmatpush1.msra.mxu0 0.0
    %663 = vmatprep.subr.mxu0 0.0
    %664 = vmatpush1.msra.mxu0 0.0
    %665 = vmatprep.subr.mxu0 0.0
    %666 = vmatpush1.msra.mxu0 0.0
    %667 = vmatprep.subr.mxu0 0.0
    %668 = vmatpush1.msra.mxu0 0.0
    %669 = vmatprep.subr.mxu0 0.0
    %670 = vmatpush1.msra.mxu0 0.0
    %671 = vmatprep.subr.mxu0 0.0
    %672 = vmatpush1.msra.mxu0 0.0
    %673 = vmatprep.subr.mxu0 0.0
    %674 = vmatpush1.msra.mxu0 0.0
    %675 = vmatprep.subr.mxu0 0.0
    %676 = vmatpush1.msra.mxu0 0.0
    %677 = vmatprep.subr.mxu0 0.0
    %678 = vmatpush1.msra.mxu0 0.0
    %679 = vmatprep.subr.mxu0 0.0
    %680 = vmatpush1.msra.mxu0 0.0
    %681 = vmatprep.subr.mxu0 0.0
    %682 = vmatpush1.msra.mxu0 0.0
    %683 = vmatprep.subr.mxu0 0.0
    %684 = vmatpush1.msra.mxu0 0.0
    %685 = vmatprep.subr.mxu0 0.0
    %686 = vmatpush1.msra.mxu0 0.0
    %687 = vmatprep.subr.mxu0 0.0
    %688 = vmatpush1.msra.mxu0 0.0
    %689 = vmatprep.subr.mxu0 0.0
    %690 = vmatpush1.msra.mxu0 0.0
    %691 = vmatprep.subr.mxu0 0.0
    %692 = vmatpush1.msra.mxu0 0.0
    %693 = vmatprep.subr.mxu0 0.0
    %694 = vmatpush1.msra.mxu0 0.0
    %695 = vmatprep.subr.mxu0 0.0
    %696 = vmatpush1.msra.mxu0 0.0
    %697 = vmatprep.subr.mxu0 0.0
    %698 = vmatpush1.msra.mxu0 0.0
    %699 = vmatprep.subr.mxu0 0.0
    %700 = vmatpush1.msra.mxu0 0.0
    %701 = vmatprep.subr.mxu0 0.0
    %702 = vmatpush1.msra.mxu0 0.0
    %703 = vmatprep.subr.mxu0 0.0
    %704 = vmatpush1.msra.mxu0 0.0
    %705 = vmatprep.subr.mxu0 0.0
    %706 = vmatpush1.msra.mxu0 0.0
    %707 = vmatprep.subr.mxu0 0.0
    %708 = vmatpush1.msra.mxu0 0.0
    %709 = vmatprep.subr.mxu0 0.0
    %710 = vmatpush1.msra.mxu0 0.0
    %711 = vmatprep.mubr.f32.mxu0 0.0
    %712 = vmatmul.mubr.f32.gmra.mrb[0].mxu0 %v645
    %v713 = vpop.f32.mrb[0].mxu0
    %v714 = vadd.f32 0.0, %v713
    %v715 = vpop.f32.mrb[0].mxu0
    %v716 = vadd.f32 0.0, %v715
    %717 = vdwg.mxu0
    %v719 = vcombine.high %v395, %v395
    %v721 = vsub.f32 %v714, %v395
    %v722 = vsub.f32 %v716, %v719
    %v723 = vmul.f32 %v721, %v721
    %v724 = vmul.f32 %v722, %v722
    %v727 = vcombine.low %v723, %v724
    %s729 = scalar_lea.vmem [#allocation7], 8
    %730 = vst [vmem:[%s729] sm:$0xff] %v727
    // Predicated region
    $region38: #{tpu_custom_call.1} parent=1 // pred_check
      _
    $region39: #{tpu_custom_call.1} parent=1 // pred_check_branch
      %732 = sbr.rel (0) target = $region41
    $region40: #{tpu_custom_call.1} parent=1 // pred_region
      %s734 = ssub.s32 256, 256
      %735 = vsyncadd [#allocation3], %s734
      %s736 = sshll.u32 [#allocation7], 4
      %s737 = int_to_ptr.vmem [resolvable:$true] %s736
      %742 = dma.vmem_to_hbm [thread:$0]  %s737, 256, %s7, [#allocation3], 128, 128, 8
    $region41: #{tpu_custom_call.1} parent=1 // pred_fallthru
      _
    // Predicated region
    $region42: #{tpu_custom_call.1} parent=1 // pred_check
      _
    $region43: #{tpu_custom_call.1} parent=1 // pred_check_branch
      %744 = sbr.rel (0) target = $region45
    $region44: #{tpu_custom_call.1} parent=1 // pred_region
      %745 = dma.done [#allocation3], 256
    $region45: #{tpu_custom_call.1} parent=1 // pred_fallthru
      _
    %746 = vsyncpa [#allocation3], 1
    %747 = vsyncpa [#allocation4], 1
    %748 = vsyncpa [#allocation6], 1

</llo_original>
